<compile_context>
chip_gen: v7x
topology: tpu7x:2x2x1
jax: 0.10.0
libtpu: 0.0.40
codegen_flags: <defaults>
</compile_context>

<pallas_src>
import math

import jax
import jax.numpy as jnp
from jax.experimental import pallas as pl
from jax.experimental.pallas import tpu as pltpu

_MIB = 1024 * 1024


def _round_up(x, m):
    return ((x + m - 1) // m) * m


def _physical_vmem_bytes():
    """Per-TensorCore VMEM capacity; conservative fallback if the query fails."""
    try:
        info = pltpu.get_tpu_info()
        cap = getattr(info, "vmem_capacity_bytes", None)
        if cap:
            return int(cap)
    except Exception:
        pass
    return 64 * _MIB  # conservative (v7x per-TC); v5e/v6e actually have 128 MiB


def _th_candidates(hidden, block_h):
    """Divisors of `hidden` that are multiples of 128 and <= block_h, best first.
    Prefers multiples of 256 (2x256x256 MXUs on v6e/v7x), then larger tiles."""
    cands = [t for t in range(128, min(hidden, block_h) + 1, 128) if hidden % t == 0]
    if hidden <= block_h:
        cands.append(hidden)
    if not cands:
        # TODO(synk): zero-pad hidden to a multiple of 128 instead of a full-width block.
        cands = [hidden]
    return sorted(set(cands), key=lambda t: (t % 256 == 0, t), reverse=True)


def _footprint_bytes(tm, th, dim, cd_size, out_size, tiled):
    """Approximate double-buffered VMEM footprint of one grid step."""
    f = 2 * tm * dim * cd_size                        # x tile
    f += 2 * dim * _round_up(th, 128) * cd_size       # w1 block
    f += 2 * 8 * _round_up(th, 128) * 4               # b1 (padded (8,128) f32 tile)
    f += 2 * _round_up(th, 8) * dim * cd_size         # w2 block
    f += 2 * 8 * _round_up(dim, 128) * 4              # b2
    f += 2 * tm * dim * out_size                      # output tile
    if tiled:
        f += tm * dim * 4                             # f32 accumulator scratch
    return f


# ----------------------------- kernels --------------------------------------


def _ffn_kernel_resident(x_ref, w1_ref, b1_ref, w2_ref, b2_ref, o_ref):
    # x_ref: (TM, dim); w1_ref: (dim, hidden); b1_ref: (1, hidden)
    # w2_ref: (hidden, dim); b2_ref: (1, dim); o_ref: (TM, dim)
    h = jnp.dot(x_ref[...], w1_ref[...], preferred_element_type=jnp.float32)
    h = jnp.maximum(h + b1_ref[...], 0.0)  # bias + ReLU in f32
    # TODO(synk): dropout omitted (p=0.0 default / eval mode -> identity).
    y = jnp.dot(h.astype(w2_ref.dtype), w2_ref[...], preferred_element_type=jnp.float32)
    o_ref[...] = (y + b2_ref[...]).astype(o_ref.dtype)


def _ffn_kernel_tiled(x_ref, w1_ref, b1_ref, w2_ref, b2_ref, o_ref, acc_ref):
    # x_ref:  (TM, dim)           w1_ref: (dim, TH)   b1_ref: (1, TH)
    # w2_ref: (TH, dim)           b2_ref: (1, dim)
    # o_ref:  (TM, dim)           acc_ref: (TM, dim) f32, resident across hidden tiles
    j = pl.program_id(1)

    @pl.when(j == 0)
    def _():
        acc_ref[...] = jnp.zeros_like(acc_ref)

    h = jnp.dot(x_ref[...], w1_ref[...], preferred_element_type=jnp.float32)
    h = jnp.maximum(h + b1_ref[...], 0.0)  # bias + ReLU in f32
    # TODO(synk): dropout omitted (p=0.0 default / eval mode -> identity).
    acc_ref[...] += jnp.dot(
        h.astype(w2_ref.dtype), w2_ref[...], preferred_element_type=jnp.float32
    )

    @pl.when(j == pl.num_programs(1) - 1)
    def _():
        o_ref[...] = (acc_ref[...] + b2_ref[...]).astype(o_ref.dtype)


# ----------------------------- wrapper --------------------------------------


def feedforward(
    x,
    w1,
    b1,
    w2,
    b2,
    *,
    block_m=None,
    block_h=512,
    compute_dtype=jnp.bfloat16,
    weight_resident=None,
    vmem_limit_bytes=None,
):
    """x: (batch, seq, dim). Weights stored (in_features, out_features).
    compute_dtype: dtype of the matmul inputs (bf16 default -> native MXU path)."""
    batch, seq, dim = x.shape
    hidden = w1.shape[1]
    m = batch * seq

    compute_dtype = jnp.dtype(compute_dtype if compute_dtype is not None else x.dtype)
    cd_size = compute_dtype.itemsize
    out_dtype = x.dtype
    out_size = jnp.dtype(out_dtype).itemsize

    x2d = x.reshape(m, dim).astype(compute_dtype)
    w1c = w1.astype(compute_dtype)
    w2c = w2.astype(compute_dtype)
    # Biases stay f32 (elementwise math in f32; v5e VPU has no bf16).
    b1_2d = b1.reshape(1, hidden).astype(jnp.float32)
    b2_2d = b2.reshape(1, dim).astype(jnp.float32)

    # --- VMEM budget: physical capacity of the attached generation, with headroom. ---
    vmem_cap = _physical_vmem_bytes()
    if vmem_limit_bytes is None:
        vmem_limit_bytes = int(min(vmem_cap - 8 * _MIB, 112 * _MIB))
    budget = int(vmem_limit_bytes * 0.9)  # leave headroom for Mosaic internal scratch

    # --- M (token) tiling. Clamp so num_m >= 2 (keeps both v7x TensorCores busy). ---
    if block_m is None:
        block_m = 1024 if cd_size <= 2 else 512
    block_m = max(8, _round_up(block_m, 8))
    tm_init = max(8, min(block_m, _round_up(-(-m // 2), 8)))
    tm = tm_init

    # --- Weight-resident fast path vs hidden-tiled accumulator path. ---
    w_bytes_db = 2 * 2 * dim * hidden * cd_size  # both weights, double-buffered
    if weight_resident is None:
        weight_resident = w_bytes_db <= vmem_cap // 4

    tiled = False
    th = hidden
    if weight_resident:
        while tm > 8 and _footprint_bytes(tm, hidden, dim, cd_size, out_size, False) > budget:
            tm = max(8, _round_up(tm // 2, 8))
        if _footprint_bytes(tm, hidden, dim, cd_size, out_size, False) > budget:
            weight_resident = False  # shouldn't happen given the 1/4-VMEM gate
            tm = tm_init
    if not weight_resident:
        tiled = True
        cands = _th_candidates(hidden, block_h)
        chosen = None
        while chosen is None:
            for t in cands:
                if _footprint_bytes(tm, t, dim, cd_size, out_size, True) <= budget:
                    chosen = t
                    break
            if chosen is None:
                if tm <= 8:
                    chosen = cands[-1]  # best effort: smallest th
                else:
                    # Shrink tm only as a last resort (tm amortizes weight streaming).
                    tm = max(8, _round_up(tm // 2, 8))
        th = chosen

    num_m = -(-m // tm)            # ragged last block handled by Pallas (no jnp.pad)
    num_h = hidden // th if hidden % th == 0 else 1
    if num_h == 1:
        th = hidden

    weight_bytes = (dim * hidden + hidden * dim) * cd_size
    weight_streams = num_m if tiled else 1
    cost = pl.CostEstimate(
        flops=4 * m * dim * hidden,  # two matmuls
        transcendentals=0,
        bytes_accessed=int(
            m * dim * cd_size                 # x in
            + weight_streams * weight_bytes   # w1, w2 (re-streamed per M tile if tiled)
            + (hidden + dim) * 4              # biases
            + m * dim * out_size              # out
        ),
    )

    if not tiled:
        out = pl.pallas_call(
            _ffn_kernel_resident,
            out_shape=jax.ShapeDtypeStruct((m, dim), out_dtype),
            grid=(num_m,),
            in_specs=[
                pl.BlockSpec((tm, dim), lambda i: (i, 0)),       # x (streamed over M)
                pl.BlockSpec((dim, hidden), lambda i: (0, 0)),   # w1 (VMEM-resident)
                pl.BlockSpec((1, hidden), lambda i: (0, 0)),     # b1 (resident)
                pl.BlockSpec((hidden, dim), lambda i: (0, 0)),   # w2 (VMEM-resident)
                pl.BlockSpec((1, dim), lambda i: (0, 0)),        # b2 (resident)
            ],
            out_specs=pl.BlockSpec((tm, dim), lambda i: (i, 0)),
            compiler_params=pltpu.CompilerParams(
                dimension_semantics=("parallel",),
                vmem_limit_bytes=vmem_limit_bytes,
            ),
            cost_estimate=cost,
        )(x2d, w1c, b1_2d, w2c, b2_2d)
    else:
        out = pl.pallas_call(
            _ffn_kernel_tiled,
            out_shape=jax.ShapeDtypeStruct((m, dim), out_dtype),
            grid=(num_m, num_h),
            in_specs=[
                pl.BlockSpec((tm, dim), lambda i, j: (i, 0)),    # x (resident across j)
                pl.BlockSpec((dim, th), lambda i, j: (0, j)),    # w1 column block
                pl.BlockSpec((1, th), lambda i, j: (0, j)),      # b1 block
                pl.BlockSpec((th, dim), lambda i, j: (j, 0)),    # w2 row block
                pl.BlockSpec((1, dim), lambda i, j: (0, 0)),     # b2 (resident)
            ],
            out_specs=pl.BlockSpec((tm, dim), lambda i, j: (i, 0)),
            scratch_shapes=[pltpu.VMEM((tm, dim), jnp.float32)],
            compiler_params=pltpu.CompilerParams(
                dimension_semantics=("parallel", "arbitrary"),
                vmem_limit_bytes=vmem_limit_bytes,
            ),
            cost_estimate=cost,
        )(x2d, w1c, b1_2d, w2c, b2_2d)

    return out.reshape(batch, seq, dim)


def init_params(key, dim, hidden_dim):
    """Deterministic init mirroring torch.nn.Linear defaults:
    U(-1/sqrt(fan_in), 1/sqrt(fan_in)) for both weight and bias."""
    k1, k2, k3, k4 = jax.random.split(key, 4)
    bound1 = 1.0 / math.sqrt(dim)
    bound2 = 1.0 / math.sqrt(hidden_dim)
    # Stored as (in_features, out_features) so the kernel does x @ W.
    w1 = jax.random.uniform(k1, (dim, hidden_dim), jnp.float32, -bound1, bound1)
    b1 = jax.random.uniform(k2, (hidden_dim,), jnp.float32, -bound1, bound1)
    w2 = jax.random.uniform(k3, (hidden_dim, dim), jnp.float32, -bound2, bound2)
    b2 = jax.random.uniform(k4, (dim,), jnp.float32, -bound2, bound2)
    return w1, b1, w2, b2


if __name__ == "__main__":
    # Small, lane-dense shapes; m = 250 exercises the megacore tm clamp (tm=128,
    # num_m=2) and Pallas's ragged last-M-block handling (122 valid rows).
    batch, seq, dim, hidden_dim = 2, 125, 128, 256

    key = jax.random.PRNGKey(0)
    kx, kp = jax.random.split(key)
    x = jax.random.normal(kx, (batch, seq, dim), dtype=jnp.float32)
    w1, b1, w2, b2 = init_params(kp, dim, hidden_dim)

    # Pure-JAX reference (high-precision matmuls).
    hp = jax.lax.Precision.HIGHEST
    h_ref = jnp.maximum(jnp.dot(x.reshape(-1, dim), w1, precision=hp) + b1, 0.0)
    y_ref = (jnp.dot(h_ref, w2, precision=hp) + b2).reshape(batch, seq, dim)

    # 1) Default path: bf16 MXU inputs + weight-resident fast path (relaxed tolerance
    #    is expected bf16 quantization, not a bug).
    y_bf16 = jax.block_until_ready(feedforward(x, w1, b1, w2, b2))
    assert jnp.allclose(y_bf16, y_ref, atol=8e-2, rtol=5e-2), "bf16 path mismatch"

    # 2) f32 inputs with forced hidden tiling exercises the accumulator path; tight check.
    y_f32 = jax.block_until_ready(
        feedforward(
            x, w1, b1, w2, b2,
            compute_dtype=jnp.float32, weight_resident=False, block_h=128,
        )
    )
    assert jnp.allclose(y_f32, y_ref, atol=1e-3, rtol=1e-3), "f32 tiled path mismatch"

    print("KERNEL_OK")
</pallas_src>

<mosaic_0001>
module attributes {stable_mosaic.version = 11 : i64} {
  func.func @_ffn_kernel_resident(%arg0: i32, %arg1: memref<128x128xbf16, #tpu.memory_space<vmem>>, %arg2: memref<128x256xbf16, #tpu.memory_space<vmem>>, %arg3: memref<1x256xf32, #tpu.memory_space<vmem>>, %arg4: memref<256x128xbf16, #tpu.memory_space<vmem>>, %arg5: memref<1x128xf32, #tpu.memory_space<vmem>>, %arg6: memref<128x128xf32, #tpu.memory_space<vmem>>) attributes {dimension_semantics = [#tpu.dimension_semantics<parallel>], iteration_bounds = array<i64: 2>, scalar_prefetch = 0 : i64, scratch_operands = 0 : i64, tpu.core_type = #tpu.core_type<tc>, window_params = [{transform_indices = @transform_0, window_bounds = array<i64: 128, 128>}, {pipeline_mode = #tpu.pipeline_mode<synchronous>, transform_indices = @transform_1, window_bounds = array<i64: 128, 256>}, {pipeline_mode = #tpu.pipeline_mode<synchronous>, transform_indices = @transform_2, window_bounds = array<i64: 1, 256>}, {pipeline_mode = #tpu.pipeline_mode<synchronous>, transform_indices = @transform_3, window_bounds = array<i64: 256, 128>}, {pipeline_mode = #tpu.pipeline_mode<synchronous>, transform_indices = @transform_4, window_bounds = array<i64: 1, 128>}, {transform_indices = @transform_5, window_bounds = array<i64: 128, 128>}]} {
    %c0 = arith.constant 0 : index
    %c0_0 = arith.constant 0 : index
    %0 = vector.load %arg1[%c0, %c0_0] : memref<128x128xbf16, #tpu.memory_space<vmem>>, vector<128x128xbf16>
    %c0_1 = arith.constant 0 : index
    %c0_2 = arith.constant 0 : index
    %1 = vector.load %arg2[%c0_1, %c0_2] : memref<128x256xbf16, #tpu.memory_space<vmem>>, vector<128x256xbf16>
    %cst = arith.constant dense<0.000000e+00> : vector<128x256xf32>
    %2 = tpu.matmul %0, %1, %cst {dimension_numbers = #tpu.dot_dimension_numbers<[1], [0], [0], [1], [0, 0, 1, 1], [], []>} : vector<128x128xbf16>, vector<128x256xbf16>, vector<128x256xf32> -> vector<128x256xf32>
    %c0_3 = arith.constant 0 : index
    %c0_4 = arith.constant 0 : index
    %3 = vector.load %arg3[%c0_3, %c0_4] : memref<1x256xf32, #tpu.memory_space<vmem>>, vector<1x256xf32>
    %4 = vector.broadcast %3 : vector<1x256xf32> to vector<128x256xf32>
    %5 = arith.addf %2, %4 : vector<128x256xf32>
    %cst_5 = arith.constant 0.000000e+00 : f32
    %6 = vector.broadcast %cst_5 : f32 to vector<128x256xf32>
    %7 = arith.maximumf %5, %6 : vector<128x256xf32>
    %8 = arith.truncf %7 : vector<128x256xf32> to vector<128x256xbf16>
    %c0_6 = arith.constant 0 : index
    %c0_7 = arith.constant 0 : index
    %9 = vector.load %arg4[%c0_6, %c0_7] : memref<256x128xbf16, #tpu.memory_space<vmem>>, vector<256x128xbf16>
    %cst_8 = arith.constant dense<0.000000e+00> : vector<128x128xf32>
    %10 = tpu.matmul %8, %9, %cst_8 {dimension_numbers = #tpu.dot_dimension_numbers<[1], [0], [0], [1], [0, 0, 1, 1], [], []>} : vector<128x256xbf16>, vector<256x128xbf16>, vector<128x128xf32> -> vector<128x128xf32>
    %c0_9 = arith.constant 0 : index
    %c0_10 = arith.constant 0 : index
    %11 = vector.load %arg5[%c0_9, %c0_10] : memref<1x128xf32, #tpu.memory_space<vmem>>, vector<1x128xf32>
    %12 = vector.broadcast %11 : vector<1x128xf32> to vector<128x128xf32>
    %13 = arith.addf %10, %12 : vector<128x128xf32>
    %c0_11 = arith.constant 0 : index
    %c0_12 = arith.constant 0 : index
    %14 = vector.load %arg6[%c0_11, %c0_12] : memref<128x128xf32, #tpu.memory_space<vmem>>, vector<128x128xf32>
    tpu.vector_store %arg6[%c0_11, %c0_12], %13 {strides = array<i32>} : memref<128x128xf32, #tpu.memory_space<vmem>>, vector<128x128xf32>,
    return
  }
  func.func @transform_0(%arg0: i32) -> (i32, i32) {
    %c0_i32 = arith.constant 0 : i32
    %c0_i32_0 = arith.constant 0 : i32
    return %arg0, %c0_i32 : i32, i32
  }
  func.func @transform_1(%arg0: i32) -> (i32, i32) {
    %c0_i32 = arith.constant 0 : i32
    %c0_i32_0 = arith.constant 0 : i32
    %c0_i32_1 = arith.constant 0 : i32
    return %c0_i32, %c0_i32_0 : i32, i32
  }
  func.func @transform_2(%arg0: i32) -> (i32, i32) {
    %c0_i32 = arith.constant 0 : i32
    %c0_i32_0 = arith.constant 0 : i32
    %c0_i32_1 = arith.constant 0 : i32
    return %c0_i32, %c0_i32_0 : i32, i32
  }
  func.func @transform_3(%arg0: i32) -> (i32, i32) {
    %c0_i32 = arith.constant 0 : i32
    %c0_i32_0 = arith.constant 0 : i32
    %c0_i32_1 = arith.constant 0 : i32
    return %c0_i32, %c0_i32_0 : i32, i32
  }
  func.func @transform_4(%arg0: i32) -> (i32, i32) {
    %c0_i32 = arith.constant 0 : i32
    %c0_i32_0 = arith.constant 0 : i32
    %c0_i32_1 = arith.constant 0 : i32
    return %c0_i32, %c0_i32_0 : i32, i32
  }
  func.func @transform_5(%arg0: i32) -> (i32, i32) {
    %c0_i32 = arith.constant 0 : i32
    %c0_i32_0 = arith.constant 0 : i32
    return %arg0, %c0_i32 : i32, i32
  }
}

</mosaic_0001>

<llo_original>
// kernel: tpu_custom_call.1
$region0: #{tpu_custom_call.1}
  #allocation0 [shape = 'u32[]', space=smem, size = 0x4, offset = 0x4, fixed_abs, tag = 'smem constant byte address 0x4 - core index']
  #allocation1 [shape = 'u32[144,128]{1,0:T(1,128)}', space=vmem, size = 0x12000, scoped, tag = 'internal scratch']
  %s0 = inlined_call_operand.hbm [shape: bf16[250,128], index: 0, kind: input, shape index: {}]
  %s1 = inlined_call_operand.hbm [shape: bf16[128,256], index: 1, kind: input, shape index: {}]
  %s2 = inlined_call_operand.vmem [shape: f32[1,256], index: 2, kind: input, shape index: {}]
  %s3 = inlined_call_operand.hbm [shape: bf16[256,128], index: 3, kind: input, shape index: {}]
  %s4 = inlined_call_operand.vmem [shape: f32[1,128], index: 4, kind: input, shape index: {}]
  %s5 = inlined_call_operand.hbm [shape: f32[250,128], index: 5, kind: output, shape index: {}]
  %s6 = sld [smem:[#allocation0]]
  $region65: #{tpu_custom_call.1} parent=0
    _
  %s8 = ssub.s32 1, %s6
  %s9 = scalar_select 0, %s8, %s6
  $region1: #{tpu_custom_call.1} parent=0
    #allocation2 [shape = 'u8[65536]{0}', space=vmem, size = 0x10000, scoped, tag = 'input window, operand 0']
    #allocation3 [shape = 's32[2]{0}', space=sflag, size = 0x8, scoped, tag = 'scoped memory for tpu_custom_call.1']
    #allocation4 [shape = 's32[2]{0}', space=sflag, size = 0x8, scoped, tag = 'scoped memory for tpu_custom_call.1']
    #allocation5 [shape = 'u8[65536]{0}', space=vmem, size = 0x10000, scoped, tag = 'input window, operand 1, single buffered']
    #allocation6 [shape = 's32[1]{0}', space=sflag, size = 0x4, scoped, tag = 'scoped memory for tpu_custom_call.1']
    #allocation7 [shape = 'u8[65536]{0}', space=vmem, size = 0x10000, scoped, tag = 'input window, operand 3, single buffered']
    #allocation8 [shape = 'u8[131072]{0}', space=vmem, size = 0x20000, scoped, tag = 'output window, operand 0']
    %10 = vsyncpa [#allocation3], 0
    %s11 = scalar_lea.sflag [#allocation3], 1
    %12 = vsyncpa %s11, 0
    %13 = vsyncpa [#allocation6], 0
    %14 = vsyncpa [#allocation4], 0
    %s15 = scalar_lea.sflag [#allocation4], 1
    %16 = vsyncpa %s15, 0
    loop: start=0, step=1, limit=4
    $region2: #{tpu_custom_call.1} parent=1 // loop_pre_header
      _
    $region3: #{tpu_custom_call.1} parent=1 // loop_header
      %s18 = sphi 0, %s22
      %p19 = scmp.ge.s32.totalorder %s18, 4
      %s28 = sphi 0, %s30
      %s31 = sphi 0, %s28
      %s32 = sphi 0, %s31
      %s48 = sphi 0, %s32
      %s52 = sphi 0, %s52
      %s54 = sphi 0, %s52
      %s55 = sphi 0, %s54
      %s69 = sphi 0, %s55
      %s73 = sphi 0, %s73
      %s75 = sphi 0, %s73
      %s76 = sphi 0, %s75
      %s90 = sphi 0, %s76
      %s94 = sphi 0, %s94
      %s96 = sphi 0, %s94
      %s97 = sphi 0, %s96
      %s111 = sphi 0, %s97
      %s115 = sphi 0, %s115
      %s117 = sphi 0, %s115
      %s118 = sphi 0, %s117
      %s132 = sphi 0, %s118
      %s138 = sphi 0, %s140
      %s141 = sphi 0, %s138
      %s142 = sphi 0, %s141
      %s158 = sphi 0, %s142
    $region4: #{tpu_custom_call.1} parent=1 // loop_header_branch
      %21 = sbr.rel (%p19) target = $region8
    $region5: #{tpu_custom_call.1} parent=1 // loop_body
      %s23 = ssub.s32 %s18, 1
      %s24 = ssub.s32 %s18, 2
      %s25 = sadd.s32 %s18, 1
      %s26 = ssub.s32 %s18, %s25
      %p27 = scmp.eq.s32.totalorder %s26, 0
      %s29 = sadd.s32 %s28, 1
      %s30 = scalar_select %p27, %s28, %s29
      %p33 = pneg %p27
      %p34 = scmp.eq.s32.totalorder %s18, 1
      %p35 = por %p33, %p34
      %p36 = scmp.ne.s32.totalorder %s28, %s31
      %p37 = scmp.eq.s32.totalorder %s18, 0
      %p38 = por %p36, %p37
      %p39 = scmp.ne.s32.totalorder %s28, %s31
      %p40 = scmp.eq.s32.totalorder %s23, 1
      %p41 = por %p39, %p40
      %p42 = scmp.ne.s32.totalorder %s31, %s32
      %p43 = scmp.eq.s32.totalorder %s23, 0
      %p44 = por %p42, %p43
      %p45 = scmp.ne.s32.totalorder %s31, %s32
      %p46 = scmp.eq.s32.totalorder %s24, 1
      %p47 = por %p45, %p46
      %p49 = scmp.ne.s32.totalorder %s32, %s48
      %p50 = scmp.eq.s32.totalorder %s24, 0
      %p51 = por %p49, %p50
      %s53 = sadd.s32 %s52, 1
      %p56 = scmp.eq.s32.totalorder %s18, 1
      %p57 = scmp.ne.s32.totalorder %s52, %s54
      %p58 = scmp.eq.s32.totalorder %s18, 0
      %p59 = por %p57, %p58
      %p60 = scmp.ne.s32.totalorder %s52, %s54
      %p61 = scmp.eq.s32.totalorder %s23, 1
      %p62 = por %p60, %p61
      %p63 = scmp.ne.s32.totalorder %s54, %s55
      %p64 = scmp.eq.s32.totalorder %s23, 0
      %p65 = por %p63, %p64
      %p66 = scmp.ne.s32.totalorder %s54, %s55
      %p67 = scmp.eq.s32.totalorder %s24, 1
      %p68 = por %p66, %p67
      %p70 = scmp.ne.s32.totalorder %s55, %s69
      %p71 = scmp.eq.s32.totalorder %s24, 0
      %p72 = por %p70, %p71
      %s74 = sadd.s32 %s73, 1
      %p77 = scmp.eq.s32.totalorder %s18, 1
      %p78 = scmp.ne.s32.totalorder %s73, %s75
      %p79 = scmp.eq.s32.totalorder %s18, 0
      %p80 = por %p78, %p79
      %p81 = scmp.ne.s32.totalorder %s73, %s75
      %p82 = scmp.eq.s32.totalorder %s23, 1
      %p83 = por %p81, %p82
      %p84 = scmp.ne.s32.totalorder %s75, %s76
      %p85 = scmp.eq.s32.totalorder %s23, 0
      %p86 = por %p84, %p85
      %p87 = scmp.ne.s32.totalorder %s75, %s76
      %p88 = scmp.eq.s32.totalorder %s24, 1
      %p89 = por %p87, %p88
      %p91 = scmp.ne.s32.totalorder %s76, %s90
      %p92 = scmp.eq.s32.totalorder %s24, 0
      %p93 = por %p91, %p92
      %s95 = sadd.s32 %s94, 1
      %p98 = scmp.eq.s32.totalorder %s18, 1
      %p99 = scmp.ne.s32.totalorder %s94, %s96
      %p100 = scmp.eq.s32.totalorder %s18, 0
      %p101 = por %p99, %p100
      %p102 = scmp.ne.s32.totalorder %s94, %s96
      %p103 = scmp.eq.s32.totalorder %s23, 1
      %p104 = por %p102, %p103
      %p105 = scmp.ne.s32.totalorder %s96, %s97
      %p106 = scmp.eq.s32.totalorder %s23, 0
      %p107 = por %p105, %p106
      %p108 = scmp.ne.s32.totalorder %s96, %s97
      %p109 = scmp.eq.s32.totalorder %s24, 1
      %p110 = por %p108, %p109
      %p112 = scmp.ne.s32.totalorder %s97, %s111
      %p113 = scmp.eq.s32.totalorder %s24, 0
      %p114 = por %p112, %p113
      %s116 = sadd.s32 %s115, 1
      %p119 = scmp.eq.s32.totalorder %s18, 1
      %p120 = scmp.ne.s32.totalorder %s115, %s117
      %p121 = scmp.eq.s32.totalorder %s18, 0
      %p122 = por %p120, %p121
      %p123 = scmp.ne.s32.totalorder %s115, %s117
      %p124 = scmp.eq.s32.totalorder %s23, 1
      %p125 = por %p123, %p124
      %p126 = scmp.ne.s32.totalorder %s117, %s118
      %p127 = scmp.eq.s32.totalorder %s23, 0
      %p128 = por %p126, %p127
      %p129 = scmp.ne.s32.totalorder %s117, %s118
      %p130 = scmp.eq.s32.totalorder %s24, 1
      %p131 = por %p129, %p130
      %p133 = scmp.ne.s32.totalorder %s118, %s132
      %p134 = scmp.eq.s32.totalorder %s24, 0
      %p135 = por %p133, %p134
      %s136 = ssub.s32 %s18, %s25
      %p137 = scmp.eq.s32.totalorder %s136, 0
      %s139 = sadd.s32 %s138, 1
      %s140 = scalar_select %p137, %s138, %s139
      %p143 = pneg %p137
      %p144 = scmp.eq.s32.totalorder %s18, 1
      %p145 = por %p143, %p144
      %p146 = scmp.ne.s32.totalorder %s138, %s141
      %p147 = scmp.eq.s32.totalorder %s18, 0
      %p148 = por %p146, %p147
      %p149 = scmp.ne.s32.totalorder %s138, %s141
      %p150 = scmp.eq.s32.totalorder %s23, 1
      %p151 = por %p149, %p150
      %p152 = scmp.ne.s32.totalorder %s141, %s142
      %p153 = scmp.eq.s32.totalorder %s23, 0
      %p154 = por %p152, %p153
      %p155 = scmp.ne.s32.totalorder %s141, %s142
      %p156 = scmp.eq.s32.totalorder %s24, 1
      %p157 = por %p155, %p156
      %p159 = scmp.ne.s32.totalorder %s142, %s158
      %p160 = scmp.eq.s32.totalorder %s24, 0
      %p161 = por %p159, %p160
      %p162 = scmp.le.s32.totalorder 1, %s18
      %p163 = scmp.lt.s32.totalorder %s18, 3
      %p164 = pnand %p162, %p163
      %p165 = pneg %p164
      // Predicated region
      $region9: #{tpu_custom_call.1} parent=5 // pred_check
        _
      $region10: #{tpu_custom_call.1} parent=5 // pred_check_branch
        %167 = sbr.rel (%p164) target = $region12
      $region11: #{tpu_custom_call.1} parent=5 // pred_region
        %s168 = ssub.s32 %s18, 1
        // Predicated region
        $region13: #{tpu_custom_call.1} parent=11 // pred_check
          %p169 = pneg %p65
        $region14: #{tpu_custom_call.1} parent=11 // pred_check_branch
          %171 = sbr.rel (%p169) target = $region16
        $region15: #{tpu_custom_call.1} parent=11 // pred_region
          %s173 = ssub.s32 2048, 2048
          %174 = vsyncadd [#allocation6], %s173
          %s175 = sshll.u32 [#allocation5], 4
          %s176 = int_to_ptr.vmem [resolvable:$true] %s175
          %181 = dma.hbm_to_vmem [thread:$0]  %s1, 2048, %s176, [#allocation6], 128, 128, 8
        $region16: #{tpu_custom_call.1} parent=11 // pred_fallthru
          _
        // Predicated region
        $region17: #{tpu_custom_call.1} parent=11 // pred_check
          %p182 = pneg %p86
        $region18: #{tpu_custom_call.1} parent=11 // pred_check_branch
          %184 = sbr.rel (%p182) target = $region20
        $region19: #{tpu_custom_call.1} parent=11 // pred_region
          _
        $region20: #{tpu_custom_call.1} parent=11 // pred_fallthru
          _
        // Predicated region
        $region21: #{tpu_custom_call.1} parent=11 // pred_check
          %p185 = pneg %p107
        $region22: #{tpu_custom_call.1} parent=11 // pred_check_branch
          %187 = sbr.rel (%p185) target = $region24
        $region23: #{tpu_custom_call.1} parent=11 // pred_region
          %s189 = ssub.s32 2048, 2048
          %190 = vsyncadd [#allocation6], %s189
          %s191 = sshll.u32 [#allocation7], 4
          %s192 = int_to_ptr.vmem [resolvable:$true] %s191
          %197 = dma.hbm_to_vmem [thread:$0]  %s3, 2048, %s192, [#allocation6], 64, 64, 4
        $region24: #{tpu_custom_call.1} parent=11 // pred_fallthru
          _
        // Predicated region
        $region25: #{tpu_custom_call.1} parent=11 // pred_check
          %p198 = pneg %p128
        $region26: #{tpu_custom_call.1} parent=11 // pred_check_branch
          %200 = sbr.rel (%p198) target = $region28
        $region27: #{tpu_custom_call.1} parent=11 // pred_region
          _
        $region28: #{tpu_custom_call.1} parent=11 // pred_fallthru
          _
      $region12: #{tpu_custom_call.1} parent=5 // pred_fallthru
        _
      %p201 = scmp.lt.s32.totalorder %s18, 2
      // Predicated region
      $region29: #{tpu_custom_call.1} parent=5 // pred_check
        %p202 = pneg %p201
      $region30: #{tpu_custom_call.1} parent=5 // pred_check_branch
        %204 = sbr.rel (%p202) target = $region32
      $region31: #{tpu_custom_call.1} parent=5 // pred_region
        // Predicated region
        $region33: #{tpu_custom_call.1} parent=31 // pred_check
          %p205 = pneg %p38
        $region34: #{tpu_custom_call.1} parent=31 // pred_check_branch
          %207 = sbr.rel (%p205) target = $region36
        $region35: #{tpu_custom_call.1} parent=31 // pred_region
          %s208 = sand.u32 %s28, 1
          %s209 = scalar_lea.sflag [#allocation3], %s208
          %s210 = sand.u32 %s28, 1
          %s211 = smul.addr %s210, 64
          %s212 = scalar_lea.vmem [#allocation2], %s211
          %s213 = smul.u32 16, %s18
          %s215 = ssub.s32 1024, 1024
          %216 = vsyncadd %s209, %s215
          %s217 = smul.addr %s213, 64
          %s218 = scalar_lea.hbm %s0, %s217
          %s219 = sshll.u32 %s212, 4
          %s220 = int_to_ptr.vmem [resolvable:$true] %s219
          %225 = dma.hbm_to_vmem [thread:$0]  %s218, 1024, %s220, %s209, 64, 64, 4
        $region36: #{tpu_custom_call.1} parent=31 // pred_fallthru
          _
      $region32: #{tpu_custom_call.1} parent=5 // pred_fallthru
        _
      %p226 = scmp.le.s32.totalorder 1, %s18
      %p227 = scmp.lt.s32.totalorder %s18, 3
      %p228 = pnand %p226, %p227
      %p229 = pneg %p228
      // Predicated region
      $region37: #{tpu_custom_call.1} parent=5 // pred_check
        _
      $region38: #{tpu_custom_call.1} parent=5 // pred_check_branch
        %231 = sbr.rel (%p228) target = $region40
      $region39: #{tpu_custom_call.1} parent=5 // pred_region
        %s232 = ssub.s32 %s18, 1
        %s233 = sand.u32 %s31, 1
        %s234 = scalar_lea.sflag [#allocation3], %s233
        %s235 = sand.u32 %s31, 1
        %s236 = smul.addr %s235, 64
        %s237 = scalar_lea.vmem [#allocation2], %s236
        // Predicated region
        $region41: #{tpu_custom_call.1} parent=39 // pred_check
          %p238 = pneg %p44
        $region42: #{tpu_custom_call.1} parent=39 // pred_check_branch
          %240 = sbr.rel (%p238) target = $region44
        $region43: #{tpu_custom_call.1} parent=39 // pred_region
          %241 = dma.done %s234, 1024
        $region44: #{tpu_custom_call.1} parent=39 // pred_fallthru
          _
        // Predicated region
        $region45: #{tpu_custom_call.1} parent=39 // pred_check
          %p242 = pneg %p65
        $region46: #{tpu_custom_call.1} parent=39 // pred_check_branch
          %244 = sbr.rel (%p242) target = $region48
        $region47: #{tpu_custom_call.1} parent=39 // pred_region
          %245 = dma.done [#allocation6], 2048
        $region48: #{tpu_custom_call.1} parent=39 // pred_fallthru
          _
        // Predicated region
        $region49: #{tpu_custom_call.1} parent=39 // pred_check
          %p246 = pneg %p107
        $region50: #{tpu_custom_call.1} parent=39 // pred_check_branch
          %248 = sbr.rel (%p246) target = $region52
        $region51: #{tpu_custom_call.1} parent=39 // pred_region
          %249 = dma.done [#allocation6], 2048
        $region52: #{tpu_custom_call.1} parent=39 // pred_fallthru
          _
        %s250 = sand.u32 %s31, 1
        %s251 = scalar_lea.sflag [#allocation3], %s250
        %s252 = sand.u32 %s31, 1
        %s253 = smul.addr %s252, 64
        %s254 = scalar_lea.vmem [#allocation2], %s253
        %p255 = pneg %p44
        %p256 = pneg %p41
        %p257 = pneg %p65
        %p258 = pneg %p62
        %p259 = pneg %p86
        %p260 = pneg %p83
        %p261 = pneg %p107
        %p262 = pneg %p104
        %p263 = pneg %p128
        %p264 = pneg %p125
        %p265 = pneg %p154
        %p266 = pneg %p151
        %s267 = sand.u32 %s141, 1
        %s268 = scalar_lea.sflag [#allocation4], %s267
        %s269 = sand.u32 %s141, 1
        %s270 = smul.addr %s269, 128
        %s271 = scalar_lea.vmem [#allocation8], %s270
        %s272 = smul.u32 16, %s23
        %s273 = smul.u32 16, %s23
        %v275 = vld [vmem:[%s237] sm:$0xf]
        %v276 = vld [vmem:[%s237 + $0x4] sm:$0xf]
        %v277 = vld [vmem:[%s237 + $0x8] sm:$0xf]
        %v278 = vld [vmem:[%s237 + $0xc] sm:$0xf]
        %v279 = vld [vmem:[%s237 + $0x10] sm:$0xf]
        %v280 = vld [vmem:[%s237 + $0x14] sm:$0xf]
        %v281 = vld [vmem:[%s237 + $0x18] sm:$0xf]
        %v282 = vld [vmem:[%s237 + $0x1c] sm:$0xf]
        %v283 = vld [vmem:[%s237 + $0x20] sm:$0xf]
        %v284 = vld [vmem:[%s237 + $0x24] sm:$0xf]
        %v285 = vld [vmem:[%s237 + $0x28] sm:$0xf]
        %v286 = vld [vmem:[%s237 + $0x2c] sm:$0xf]
        %v287 = vld [vmem:[%s237 + $0x30] sm:$0xf]
        %v288 = vld [vmem:[%s237 + $0x34] sm:$0xf]
        %v289 = vld [vmem:[%s237 + $0x38] sm:$0xf]
        %v290 = vld [vmem:[%s237 + $0x3c] sm:$0xf]
        %v291 = vld [vmem:[#allocation5] sm:$0xff]
        %v292 = vld [vmem:[#allocation5 + $0x8] sm:$0xff]
        %v293 = vld [vmem:[#allocation5 + $0x10] sm:$0xff]
        %v294 = vld [vmem:[#allocation5 + $0x18] sm:$0xff]
        %v295 = vld [vmem:[#allocation5 + $0x20] sm:$0xff]
        %v296 = vld [vmem:[#allocation5 + $0x28] sm:$0xff]
        %v297 = vld [vmem:[#allocation5 + $0x30] sm:$0xff]
        %v298 = vld [vmem:[#allocation5 + $0x38] sm:$0xff]
        %v299 = vld [vmem:[#allocation5 + $0x40] sm:$0xff]
        %v300 = vld [vmem:[#allocation5 + $0x48] sm:$0xff]
        %v301 = vld [vmem:[#allocation5 + $0x50] sm:$0xff]
        %v302 = vld [vmem:[#allocation5 + $0x58] sm:$0xff]
        %v303 = vld [vmem:[#allocation5 + $0x60] sm:$0xff]
        %v304 = vld [vmem:[#allocation5 + $0x68] sm:$0xff]
        %v305 = vld [vmem:[#allocation5 + $0x70] sm:$0xff]
        %v306 = vld [vmem:[#allocation5 + $0x78] sm:$0xff]
        %v307 = vld [vmem:[%s2] sm:$0x3]
        %v309 = vlaneseq
        %v310 = vshrl.u32 %v309, 7
        %v311 = vsub.s32 0, %v310
        %v312 = vrot.slane %v307, %v311
        %v313 = vlaneseq
        %v314 = vshrl.u32 %v313, 7
        %v315 = vsub.s32 1, %v314
        %v316 = vrot.slane %v307, %v315
        %v335 = vunpack.c.l.b16 %v275
        %v336 = vunpack.c.l.b16 %v276
        %v337 = vunpack.c.l.b16 %v277
        %v338 = vunpack.c.l.b16 %v278
        %v339 = vunpack.c.l.b16 %v279
        %v340 = vunpack.c.l.b16 %v280
        %v341 = vunpack.c.l.b16 %v281
        %v342 = vunpack.c.l.b16 %v282
        %v343 = vunpack.c.l.b16 %v283
        %v344 = vunpack.c.l.b16 %v284
        %v345 = vunpack.c.l.b16 %v285
        %v346 = vunpack.c.l.b16 %v286
        %v347 = vunpack.c.l.b16 %v287
        %v348 = vunpack.c.l.b16 %v288
        %v349 = vunpack.c.l.b16 %v289
        %v350 = vunpack.c.l.b16 %v290
        %v351 = vpack.c.b16 %v336, %v335
        %v352 = vpack.c.b16 %v338, %v337
        %v353 = vpack.c.b16 %v340, %v339
        %v354 = vpack.c.b16 %v342, %v341
        %v355 = vpack.c.b16 %v344, %v343
        %v356 = vpack.c.b16 %v346, %v345
        %v357 = vpack.c.b16 %v348, %v347
        %v358 = vpack.c.b16 %v350, %v349
        %v383 = vunpack.c.l.b16 %v291
        %v384 = vunpack.c.h.b16 %v291
        %v385 = vunpack.c.l.b16 %v292
        %v386 = vunpack.c.h.b16 %v292
        %v387 = vunpack.c.l.b16 %v293
        %v388 = vunpack.c.h.b16 %v293
        %v389 = vunpack.c.l.b16 %v294
        %v390 = vunpack.c.h.b16 %v294
        %v391 = vunpack.c.l.b16 %v295
        %v392 = vunpack.c.h.b16 %v295
        %v393 = vunpack.c.l.b16 %v296
        %v394 = vunpack.c.h.b16 %v296
        %v395 = vunpack.c.l.b16 %v297
        %v396 = vunpack.c.h.b16 %v297
        %v397 = vunpack.c.l.b16 %v298
        %v398 = vunpack.c.h.b16 %v298
        %v399 = vunpack.c.l.b16 %v299
        %v400 = vunpack.c.h.b16 %v299
        %v401 = vunpack.c.l.b16 %v300
        %v402 = vunpack.c.h.b16 %v300
        %v403 = vunpack.c.l.b16 %v301
        %v404 = vunpack.c.h.b16 %v301
        %v405 = vunpack.c.l.b16 %v302
        %v406 = vunpack.c.h.b16 %v302
        %v407 = vunpack.c.l.b16 %v303
        %v408 = vunpack.c.h.b16 %v303
        %v409 = vunpack.c.l.b16 %v304
        %v410 = vunpack.c.h.b16 %v304
        %v411 = vunpack.c.l.b16 %v305
        %v412 = vunpack.c.h.b16 %v305
        %v413 = vunpack.c.l.b16 %v306
        %v414 = vunpack.c.h.b16 %v306
        %v415 = vpack.c.b16 %v385, %v383
        %v416 = vpack.c.b16 %v386, %v384
        %v417 = vpack.c.b16 %v389, %v387
        %v418 = vpack.c.b16 %v390, %v388
        %v419 = vpack.c.b16 %v393, %v391
        %v420 = vpack.c.b16 %v394, %v392
        %v421 = vpack.c.b16 %v397, %v395
        %v422 = vpack.c.b16 %v398, %v396
        %v423 = vpack.c.b16 %v401, %v399
        %v424 = vpack.c.b16 %v402, %v400
        %v425 = vpack.c.b16 %v405, %v403
        %v426 = vpack.c.b16 %v406, %v404
        %v427 = vpack.c.b16 %v409, %v407
        %v428 = vpack.c.b16 %v410, %v408
        %v429 = vpack.c.b16 %v413, %v411
        %v430 = vpack.c.b16 %v414, %v412
        %447 = vmatprep.subr.bf16.mxu0 %v416
        %448 = vmatpush1.bf16.msra.mxu0 %v415
        %449 = vmatprep.subr.bf16.mxu0 %v418
        %450 = vmatpush1.bf16.msra.mxu0 %v417
        %451 = vmatprep.subr.bf16.mxu0 %v420
        %452 = vmatpush1.bf16.msra.mxu0 %v419
        %453 = vmatprep.subr.bf16.mxu0 %v422
        %454 = vmatpush1.bf16.msra.mxu0 %v421
        %455 = vmatprep.subr.bf16.mxu0 %v424
        %456 = vmatpush1.bf16.msra.mxu0 %v423
        %457 = vmatprep.subr.bf16.mxu0 %v426
        %458 = vmatpush1.bf16.msra.mxu0 %v425
        %459 = vmatprep.subr.bf16.mxu0 %v428
        %460 = vmatpush1.bf16.msra.mxu0 %v427
        %461 = vmatprep.subr.bf16.mxu0 %v430
        %462 = vmatpush1.bf16.msra.mxu0 %v429
        %463 = vmatprep.subr.bf16.mxu0 0
        %464 = vmatpush1.bf16.msra.mxu0 0
        %465 = vmatprep.subr.bf16.mxu0 0
        %466 = vmatpush1.bf16.msra.mxu0 0
        %467 = vmatprep.subr.bf16.mxu0 0
        %468 = vmatpush1.bf16.msra.mxu0 0
        %469 = vmatprep.subr.bf16.mxu0 0
        %470 = vmatpush1.bf16.msra.mxu0 0
        %471 = vmatprep.subr.bf16.mxu0 0
        %472 = vmatpush1.bf16.msra.mxu0 0
        %473 = vmatprep.subr.bf16.mxu0 0
        %474 = vmatpush1.bf16.msra.mxu0 0
        %475 = vmatprep.subr.bf16.mxu0 0
        %476 = vmatpush1.bf16.msra.mxu0 0
        %477 = vmatprep.subr.bf16.mxu0 0
        %478 = vmatpush1.bf16.msra.mxu0 0
        %479 = vmatprep.mubr.bf16.mxu0 0
        %480 = vmatmul.mubr.bf16.gmra.mrb[0].mxu0 %v351
        %v481 = vpop.f32.mrb[0].mxu0
        %v482 = vadd.f32 %v312, %v481
        %v483 = vpop.f32.mrb[0].mxu0
        %v484 = vadd.f32 %v316, %v483
        %v485 = vpop.f32.mrb[0].mxu0
        %v486 = vadd.f32 %v312, %v485
        %v487 = vpop.f32.mrb[0].mxu0
        %v488 = vadd.f32 %v316, %v487
        %489 = vmatprep.mubr.bf16.mxu0 0
        %490 = vmatmul.mubr.bf16.gmra.mrb[0].mxu0 %v352
        %v491 = vpop.f32.mrb[0].mxu0
        %v492 = vadd.f32 %v312, %v491
        %v493 = vpop.f32.mrb[0].mxu0
        %v494 = vadd.f32 %v316, %v493
        %v495 = vpop.f32.mrb[0].mxu0
        %v496 = vadd.f32 %v312, %v495
        %v497 = vpop.f32.mrb[0].mxu0
        %v498 = vadd.f32 %v316, %v497
        %499 = vmatprep.mubr.bf16.mxu0 0
        %500 = vmatmul.mubr.bf16.gmra.mrb[0].mxu0 %v353
        %v501 = vpop.f32.mrb[0].mxu0
        %v502 = vadd.f32 %v312, %v501
        %v503 = vpop.f32.mrb[0].mxu0
        %v504 = vadd.f32 %v316, %v503
        %v505 = vpop.f32.mrb[0].mxu0
        %v506 = vadd.f32 %v312, %v505
        %v507 = vpop.f32.mrb[0].mxu0
        %v508 = vadd.f32 %v316, %v507
        %509 = vmatprep.mubr.bf16.mxu0 0
        %510 = vmatmul.mubr.bf16.gmra.mrb[0].mxu0 %v354
        %v511 = vpop.f32.mrb[0].mxu0
        %v512 = vadd.f32 %v312, %v511
        %v513 = vpop.f32.mrb[0].mxu0
        %v514 = vadd.f32 %v316, %v513
        %v515 = vpop.f32.mrb[0].mxu0
        %v516 = vadd.f32 %v312, %v515
        %v517 = vpop.f32.mrb[0].mxu0
        %v518 = vadd.f32 %v316, %v517
        %519 = vmatprep.mubr.bf16.mxu0 0
        %520 = vmatmul.mubr.bf16.gmra.mrb[0].mxu0 %v355
        %v521 = vpop.f32.mrb[0].mxu0
        %v522 = vadd.f32 %v312, %v521
        %v523 = vpop.f32.mrb[0].mxu0
        %v524 = vadd.f32 %v316, %v523
        %v525 = vpop.f32.mrb[0].mxu0
        %v526 = vadd.f32 %v312, %v525
        %v527 = vpop.f32.mrb[0].mxu0
        %v528 = vadd.f32 %v316, %v527
        %529 = vmatprep.mubr.bf16.mxu0 0
        %530 = vmatmul.mubr.bf16.gmra.mrb[0].mxu0 %v356
        %v531 = vpop.f32.mrb[0].mxu0
        %v532 = vadd.f32 %v312, %v531
        %v533 = vpop.f32.mrb[0].mxu0
        %v534 = vadd.f32 %v316, %v533
        %v535 = vpop.f32.mrb[0].mxu0
        %v536 = vadd.f32 %v312, %v535
        %v537 = vpop.f32.mrb[0].mxu0
        %v538 = vadd.f32 %v316, %v537
        %539 = vmatprep.mubr.bf16.mxu0 0
        %540 = vmatmul.mubr.bf16.gmra.mrb[0].mxu0 %v357
        %v541 = vpop.f32.mrb[0].mxu0
        %v542 = vadd.f32 %v312, %v541
        %v543 = vpop.f32.mrb[0].mxu0
        %v544 = vadd.f32 %v316, %v543
        %v545 = vpop.f32.mrb[0].mxu0
        %v546 = vadd.f32 %v312, %v545
        %v547 = vpop.f32.mrb[0].mxu0
        %v548 = vadd.f32 %v316, %v547
        %549 = vmatprep.mubr.bf16.mxu0 0
        %550 = vmatmul.mubr.bf16.gmra.mrb[0].mxu0 %v358
        %v551 = vpop.f32.mrb[0].mxu0
        %v552 = vadd.f32 %v312, %v551
        %v553 = vpop.f32.mrb[0].mxu0
        %v554 = vadd.f32 %v316, %v553
        %v555 = vpop.f32.mrb[0].mxu0
        %v556 = vadd.f32 %v312, %v555
        %v557 = vpop.f32.mrb[0].mxu0
        %v558 = vadd.f32 %v316, %v557
        %559 = vdwg.mxu0
        %v560 = vmax.f32 %v482, 0.0
        %v561 = vmax.f32 %v484, 0.0
        %v562 = vmax.f32 %v486, 0.0
        %v563 = vmax.f32 %v488, 0.0
        %v564 = vmax.f32 %v492, 0.0
        %v565 = vmax.f32 %v494, 0.0
        %v566 = vmax.f32 %v496, 0.0
        %v567 = vmax.f32 %v498, 0.0
        %v568 = vmax.f32 %v502, 0.0
        %v569 = vmax.f32 %v504, 0.0
        %v570 = vmax.f32 %v506, 0.0
        %v571 = vmax.f32 %v508, 0.0
        %v572 = vmax.f32 %v512, 0.0
        %v573 = vmax.f32 %v514, 0.0
        %v574 = vmax.f32 %v516, 0.0
        %v575 = vmax.f32 %v518, 0.0
        %v576 = vmax.f32 %v522, 0.0
        %v577 = vmax.f32 %v524, 0.0
        %v578 = vmax.f32 %v526, 0.0
        %v579 = vmax.f32 %v528, 0.0
        %v580 = vmax.f32 %v532, 0.0
        %v581 = vmax.f32 %v534, 0.0
        %v582 = vmax.f32 %v536, 0.0
        %v583 = vmax.f32 %v538, 0.0
        %v584 = vmax.f32 %v542, 0.0
        %v585 = vmax.f32 %v544, 0.0
        %v586 = vmax.f32 %v546, 0.0
        %v587 = vmax.f32 %v548, 0.0
        %v588 = vmax.f32 %v552, 0.0
        %v589 = vmax.f32 %v554, 0.0
        %v590 = vmax.f32 %v556, 0.0
        %v591 = vmax.f32 %v558, 0.0
        %v592 = vpack.c.bf16 %v562, %v560
        %v593 = vpack.c.bf16 %v563, %v561
        %v594 = vpack.c.bf16 %v566, %v564
        %v595 = vpack.c.bf16 %v567, %v565
        %v596 = vpack.c.bf16 %v570, %v568
        %v597 = vpack.c.bf16 %v571, %v569
        %v598 = vpack.c.bf16 %v574, %v572
        %v599 = vpack.c.bf16 %v575, %v573
        %v600 = vpack.c.bf16 %v578, %v576
        %v601 = vpack.c.bf16 %v579, %v577
        %v602 = vpack.c.bf16 %v582, %v580
        %v603 = vpack.c.bf16 %v583, %v581
        %v604 = vpack.c.bf16 %v586, %v584
        %v605 = vpack.c.bf16 %v587, %v585
        %v606 = vpack.c.bf16 %v590, %v588
        %v607 = vpack.c.bf16 %v591, %v589
        %v608 = vld [vmem:[#allocation7] sm:$0xf]
        %v609 = vld [vmem:[#allocation7 + $0x4] sm:$0xf]
        %v610 = vld [vmem:[#allocation7 + $0x8] sm:$0xf]
        %v611 = vld [vmem:[#allocation7 + $0xc] sm:$0xf]
        %v612 = vld [vmem:[#allocation7 + $0x10] sm:$0xf]
        %v613 = vld [vmem:[#allocation7 + $0x14] sm:$0xf]
        %v614 = vld [vmem:[#allocation7 + $0x18] sm:$0xf]
        %v615 = vld [vmem:[#allocation7 + $0x1c] sm:$0xf]
        %v616 = vld [vmem:[#allocation7 + $0x20] sm:$0xf]
        %v617 = vld [vmem:[#allocation7 + $0x24] sm:$0xf]
        %v618 = vld [vmem:[#allocation7 + $0x28] sm:$0xf]
        %v619 = vld [vmem:[#allocation7 + $0x2c] sm:$0xf]
        %v620 = vld [vmem:[#allocation7 + $0x30] sm:$0xf]
        %v621 = vld [vmem:[#allocation7 + $0x34] sm:$0xf]
        %v622 = vld [vmem:[#allocation7 + $0x38] sm:$0xf]
        %v623 = vld [vmem:[#allocation7 + $0x3c] sm:$0xf]
        %v624 = vld [vmem:[#allocation7 + $0x40] sm:$0xf]
        %v625 = vld [vmem:[#allocation7 + $0x44] sm:$0xf]
        %v626 = vld [vmem:[#allocation7 + $0x48] sm:$0xf]
        %v627 = vld [vmem:[#allocation7 + $0x4c] sm:$0xf]
        %v628 = vld [vmem:[#allocation7 + $0x50] sm:$0xf]
        %v629 = vld [vmem:[#allocation7 + $0x54] sm:$0xf]
        %v630 = vld [vmem:[#allocation7 + $0x58] sm:$0xf]
        %v631 = vld [vmem:[#allocation7 + $0x5c] sm:$0xf]
        %v632 = vld [vmem:[#allocation7 + $0x60] sm:$0xf]
        %v633 = vld [vmem:[#allocation7 + $0x64] sm:$0xf]
        %v634 = vld [vmem:[#allocation7 + $0x68] sm:$0xf]
        %v635 = vld [vmem:[#allocation7 + $0x6c] sm:$0xf]
        %v636 = vld [vmem:[#allocation7 + $0x70] sm:$0xf]
        %v637 = vld [vmem:[#allocation7 + $0x74] sm:$0xf]
        %v638 = vld [vmem:[#allocation7 + $0x78] sm:$0xf]
        %v639 = vld [vmem:[#allocation7 + $0x7c] sm:$0xf]
        %v640 = vld [vmem:[%s4] sm:$0x1]
        %v642 = vlaneseq
        %v643 = vshrl.u32 %v642, 7
        %v644 = vsub.s32 0, %v643
        %v645 = vrot.slane %v640, %v644
        %v679 = vunpack.c.l.b16 %v608
        %v680 = vunpack.c.l.b16 %v609
        %v681 = vunpack.c.l.b16 %v610
        %v682 = vunpack.c.l.b16 %v611
        %v683 = vunpack.c.l.b16 %v612
        %v684 = vunpack.c.l.b16 %v613
        %v685 = vunpack.c.l.b16 %v614
        %v686 = vunpack.c.l.b16 %v615
        %v687 = vunpack.c.l.b16 %v616
        %v688 = vunpack.c.l.b16 %v617
        %v689 = vunpack.c.l.b16 %v618
        %v690 = vunpack.c.l.b16 %v619
        %v691 = vunpack.c.l.b16 %v620
        %v692 = vunpack.c.l.b16 %v621
        %v693 = vunpack.c.l.b16 %v622
        %v694 = vunpack.c.l.b16 %v623
        %v695 = vunpack.c.l.b16 %v624
        %v696 = vunpack.c.l.b16 %v625
        %v697 = vunpack.c.l.b16 %v626
        %v698 = vunpack.c.l.b16 %v627
        %v699 = vunpack.c.l.b16 %v628
        %v700 = vunpack.c.l.b16 %v629
        %v701 = vunpack.c.l.b16 %v630
        %v702 = vunpack.c.l.b16 %v631
        %v703 = vunpack.c.l.b16 %v632
        %v704 = vunpack.c.l.b16 %v633
        %v705 = vunpack.c.l.b16 %v634
        %v706 = vunpack.c.l.b16 %v635
        %v707 = vunpack.c.l.b16 %v636
        %v708 = vunpack.c.l.b16 %v637
        %v709 = vunpack.c.l.b16 %v638
        %v710 = vunpack.c.l.b16 %v639
        %v711 = vpack.c.b16 %v680, %v679
        %v712 = vpack.c.b16 %v682, %v681
        %v713 = vpack.c.b16 %v684, %v683
        %v714 = vpack.c.b16 %v686, %v685
        %v715 = vpack.c.b16 %v688, %v687
        %v716 = vpack.c.b16 %v690, %v689
        %v717 = vpack.c.b16 %v692, %v691
        %v718 = vpack.c.b16 %v694, %v693
        %v719 = vpack.c.b16 %v696, %v695
        %v720 = vpack.c.b16 %v698, %v697
        %v721 = vpack.c.b16 %v700, %v699
        %v722 = vpack.c.b16 %v702, %v701
        %v723 = vpack.c.b16 %v704, %v703
        %v724 = vpack.c.b16 %v706, %v705
        %v725 = vpack.c.b16 %v708, %v707
        %v726 = vpack.c.b16 %v710, %v709
        %743 = vmatprep.subr.bf16.mxu0 0
        %744 = vmatpush1.bf16.msra.mxu0 %v711
        %745 = vmatprep.subr.bf16.mxu0 0
        %746 = vmatpush1.bf16.msra.mxu0 %v712
        %747 = vmatprep.subr.bf16.mxu0 0
        %748 = vmatpush1.bf16.msra.mxu0 %v713
        %749 = vmatprep.subr.bf16.mxu0 0
        %750 = vmatpush1.bf16.msra.mxu0 %v714
        %751 = vmatprep.subr.bf16.mxu0 0
        %752 = vmatpush1.bf16.msra.mxu0 %v715
        %753 = vmatprep.subr.bf16.mxu0 0
        %754 = vmatpush1.bf16.msra.mxu0 %v716
        %755 = vmatprep.subr.bf16.mxu0 0
        %756 = vmatpush1.bf16.msra.mxu0 %v717
        %757 = vmatprep.subr.bf16.mxu0 0
        %758 = vmatpush1.bf16.msra.mxu0 %v718
        %759 = vmatprep.subr.bf16.mxu0 0
        %760 = vmatpush1.bf16.msra.mxu0 %v719
        %761 = vmatprep.subr.bf16.mxu0 0
        %762 = vmatpush1.bf16.msra.mxu0 %v720
        %763 = vmatprep.subr.bf16.mxu0 0
        %764 = vmatpush1.bf16.msra.mxu0 %v721
        %765 = vmatprep.subr.bf16.mxu0 0
        %766 = vmatpush1.bf16.msra.mxu0 %v722
        %767 = vmatprep.subr.bf16.mxu0 0
        %768 = vmatpush1.bf16.msra.mxu0 %v723
        %769 = vmatprep.subr.bf16.mxu0 0
        %770 = vmatpush1.bf16.msra.mxu0 %v724
        %771 = vmatprep.subr.bf16.mxu0 0
        %772 = vmatpush1.bf16.msra.mxu0 %v725
        %773 = vmatprep.subr.bf16.mxu0 0
        %774 = vmatpush1.bf16.msra.mxu0 %v726
        %775 = vmatprep.mubr.bf16.mxu0 %v593
        %776 = vmatmul.mubr.bf16.gmra.mrb[0].mxu0 %v592
        %v777 = vpop.f32.mrb[0].mxu0
        %v778 = vadd.f32 %v645, %v777
        %v779 = vpop.f32.mrb[0].mxu0
        %v780 = vpop.f32.mrb[0].mxu0
        %v781 = vadd.f32 %v645, %v780
        %v782 = vpop.f32.mrb[0].mxu0
        %783 = vmatprep.mubr.bf16.mxu0 %v595
        %784 = vmatmul.mubr.bf16.gmra.mrb[0].mxu0 %v594
        %v785 = vpop.f32.mrb[0].mxu0
        %v786 = vadd.f32 %v645, %v785
        %v787 = vpop.f32.mrb[0].mxu0
        %v788 = vpop.f32.mrb[0].mxu0
        %v789 = vadd.f32 %v645, %v788
        %v790 = vpop.f32.mrb[0].mxu0
        %791 = vmatprep.mubr.bf16.mxu0 %v597
        %792 = vmatmul.mubr.bf16.gmra.mrb[0].mxu0 %v596
        %v793 = vpop.f32.mrb[0].mxu0
        %v794 = vadd.f32 %v645, %v793
        %v795 = vpop.f32.mrb[0].mxu0
        %v796 = vpop.f32.mrb[0].mxu0
        %v797 = vadd.f32 %v645, %v796
        %v798 = vpop.f32.mrb[0].mxu0
        %799 = vmatprep.mubr.bf16.mxu0 %v599
        %800 = vmatmul.mubr.bf16.gmra.mrb[0].mxu0 %v598
        %v801 = vpop.f32.mrb[0].mxu0
        %v802 = vadd.f32 %v645, %v801
        %v803 = vpop.f32.mrb[0].mxu0
        %v804 = vpop.f32.mrb[0].mxu0
        %v805 = vadd.f32 %v645, %v804
        %v806 = vpop.f32.mrb[0].mxu0
        %807 = vmatprep.mubr.bf16.mxu0 %v601
        %808 = vmatmul.mubr.bf16.gmra.mrb[0].mxu0 %v600
        %v809 = vpop.f32.mrb[0].mxu0
        %v810 = vadd.f32 %v645, %v809
        %v811 = vpop.f32.mrb[0].mxu0
        %v812 = vpop.f32.mrb[0].mxu0
        %v813 = vadd.f32 %v645, %v812
        %v814 = vpop.f32.mrb[0].mxu0
        %815 = vmatprep.mubr.bf16.mxu0 %v603
        %816 = vmatmul.mubr.bf16.gmra.mrb[0].mxu0 %v602
        %v817 = vpop.f32.mrb[0].mxu0
        %v818 = vadd.f32 %v645, %v817
        %v819 = vpop.f32.mrb[0].mxu0
        %v820 = vpop.f32.mrb[0].mxu0
        %v821 = vadd.f32 %v645, %v820
        %v822 = vpop.f32.mrb[0].mxu0
        %823 = vmatprep.mubr.bf16.mxu0 %v605
        %824 = vmatmul.mubr.bf16.gmra.mrb[0].mxu0 %v604
        %v825 = vpop.f32.mrb[0].mxu0
        %v826 = vadd.f32 %v645, %v825
        %v827 = vpop.f32.mrb[0].mxu0
        %v828 = vpop.f32.mrb[0].mxu0
        %v829 = vadd.f32 %v645, %v828
        %v830 = vpop.f32.mrb[0].mxu0
        %831 = vmatprep.mubr.bf16.mxu0 %v607
        %832 = vmatmul.mubr.bf16.gmra.mrb[0].mxu0 %v606
        %v833 = vpop.f32.mrb[0].mxu0
        %v834 = vadd.f32 %v645, %v833
        %v835 = vpop.f32.mrb[0].mxu0
        %v836 = vpop.f32.mrb[0].mxu0
        %v837 = vadd.f32 %v645, %v836
        %v838 = vpop.f32.mrb[0].mxu0
        %839 = vdwg.mxu0
        %840 = vst [vmem:[%s271] sm:$0xff] %v778
        %841 = vst [vmem:[%s271 + $0x8] sm:$0xff] %v781
        %842 = vst [vmem:[%s271 + $0x10] sm:$0xff] %v786
        %843 = vst [vmem:[%s271 + $0x18] sm:$0xff] %v789
        %844 = vst [vmem:[%s271 + $0x20] sm:$0xff] %v794
        %845 = vst [vmem:[%s271 + $0x28] sm:$0xff] %v797
        %846 = vst [vmem:[%s271 + $0x30] sm:$0xff] %v802
        %847 = vst [vmem:[%s271 + $0x38] sm:$0xff] %v805
        %848 = vst [vmem:[%s271 + $0x40] sm:$0xff] %v810
        %849 = vst [vmem:[%s271 + $0x48] sm:$0xff] %v813
        %850 = vst [vmem:[%s271 + $0x50] sm:$0xff] %v818
        %851 = vst [vmem:[%s271 + $0x58] sm:$0xff] %v821
        %852 = vst [vmem:[%s271 + $0x60] sm:$0xff] %v826
        %853 = vst [vmem:[%s271 + $0x68] sm:$0xff] %v829
        %854 = vst [vmem:[%s271 + $0x70] sm:$0xff] %v834
        %855 = vst [vmem:[%s271 + $0x78] sm:$0xff] %v837
        %s856 = sand.u32 %s141, 1
        %s857 = scalar_lea.sflag [#allocation4], %s856
        %s858 = sand.u32 %s141, 1
        %s859 = smul.addr %s858, 128
        %s860 = scalar_lea.vmem [#allocation8], %s859
        // Predicated region
        $region53: #{tpu_custom_call.1} parent=39 // pred_check
          %p861 = pneg %p151
        $region54: #{tpu_custom_call.1} parent=39 // pred_check_branch
          %863 = sbr.rel (%p861) target = $region56
        $region55: #{tpu_custom_call.1} parent=39 // pred_region
          %s864 = smul.u32 16, %s23
          %s866 = ssub.s32 2048, 2048
          %867 = vsyncadd %s857, %s866
          %s868 = smul.addr %s864, 128
          %s869 = scalar_lea.hbm %s5, %s868
          %s870 = sshll.u32 %s860, 4
          %s871 = int_to_ptr.vmem [resolvable:$true] %s870
          %876 = dma.vmem_to_hbm [thread:$0]  %s871, 2048, %s869, %s857, 128, 128, 8
        $region56: #{tpu_custom_call.1} parent=39 // pred_fallthru
          _
      $region40: #{tpu_custom_call.1} parent=5 // pred_fallthru
        _
      %p877 = scmp.le.s32.totalorder 2, %s18
      // Predicated region
      $region57: #{tpu_custom_call.1} parent=5 // pred_check
        %p878 = pneg %p877
      $region58: #{tpu_custom_call.1} parent=5 // pred_check_branch
        %880 = sbr.rel (%p878) target = $region60
      $region59: #{tpu_custom_call.1} parent=5 // pred_region
        %s881 = ssub.s32 %s18, 2
        // Predicated region
        $region61: #{tpu_custom_call.1} parent=59 // pred_check
          %p882 = pneg %p157
        $region62: #{tpu_custom_call.1} parent=59 // pred_check_branch
          %884 = sbr.rel (%p882) target = $region64
        $region63: #{tpu_custom_call.1} parent=59 // pred_region
          %s885 = sand.u32 %s142, 1
          %s886 = scalar_lea.sflag [#allocation4], %s885
          %s887 = sand.u32 %s142, 1
          %s888 = smul.addr %s887, 128
          %s889 = scalar_lea.vmem [#allocation8], %s888
          %890 = dma.done %s886, 2048
        $region64: #{tpu_custom_call.1} parent=59 // pred_fallthru
          _
      $region60: #{tpu_custom_call.1} parent=5 // pred_fallthru
        _
    $region6: #{tpu_custom_call.1} parent=1 // loop_footer
      %s22 = sadd.s32 1, %s18
    $region7: #{tpu_custom_call.1} parent=1 // loop_footer_branch
      %17 = sbr.rel target = $region3
    $region8: #{tpu_custom_call.1} parent=1 // loop_exit
      _
    %891 = vsyncpa [#allocation3], 1
    %s892 = scalar_lea.sflag [#allocation3], 1
    %893 = vsyncpa %s892, 1
    %894 = vsyncpa [#allocation6], 1
    %895 = vsyncpa [#allocation4], 1
    %s896 = scalar_lea.sflag [#allocation4], 1
    %897 = vsyncpa %s896, 1

</llo_original>
